<compile_context>
chip_gen: v6e
topology: v6e:2x2x1
jax: 0.10.0
libtpu: 0.0.40
codegen_flags: <defaults>
</compile_context>

<pallas_src>
import functools

import jax
import jax.numpy as jnp
from jax import lax
from jax.experimental import pallas as pl
from jax.experimental.pallas import tpu as pltpu


# ----------------------------- helpers --------------------------------------

def _round_up(x, m):
    return ((x + m - 1) // m) * m


def _pick_tile(padded_dim, max_tile, quantum):
    """Largest multiple of `quantum` that divides `padded_dim` and is <= max_tile."""
    best = quantum
    t = quantum
    limit = min(max_tile, padded_dim)
    while t <= limit:
        if padded_dim % t == 0:
            best = t
        t += quantum
    return best


def _device_kind():
    try:
        return jax.devices()[0].device_kind.lower()
    except Exception:
        return ""


def _use_int8_mxu():
    # v4/v5/v6 MXUs have a native int8 path; v7x is bf16/fp8-only (and fp8
    # cannot represent the int8 range exactly), so use bf16 there.
    kind = _device_kind()
    return any(t in kind for t in ("v4", "v5", "v6"))


def _vmem_limit_bytes():
    kind = _device_kind()
    if "v7" in kind or "7x" in kind:
        return 48 * 1024 * 1024          # v7x: 64 MiB physical VMEM per core
    if any(t in kind for t in ("v4", "v5", "v6")):
        return 96 * 1024 * 1024          # 128 MiB physical
    return None


def _default_tiles():
    kind = _device_kind()
    if "v7" in kind or "7x" in kind:
        return 256, 256, 512             # tm, tn, tk (tight VMEM budget)
    if "v6" in kind:
        return 256, 512, 512
    if "v5" in kind:
        return 256, 256, 512
    return 256, 256, 512


def _compiler_params(dimension_semantics):
    kwargs = dict(dimension_semantics=dimension_semantics)
    limit = _vmem_limit_bytes()
    if limit is not None:
        kwargs["vmem_limit_bytes"] = limit
    return pltpu.CompilerParams(**kwargs)


# --------------------- pass 1: activation row quantization ------------------

def _act_quant_kernel(x_ref, xq_ref, sa_ref):
    # x_ref: (tm, K) bf16 -> xq_ref: (tm, K) int8, sa_ref: (tm, 1) f32 (= amax/127)
    xf = x_ref[...].astype(jnp.float32)
    amax = jnp.maximum(jnp.max(jnp.abs(xf), axis=-1, keepdims=True), 1e-8)
    q = jnp.clip(jnp.round(xf * (127.0 / amax)), -127.0, 127.0)
    xq_ref[...] = q.astype(jnp.int8)
    sa_ref[...] = amax * (1.0 / 127.0)


def _quantize_activations(x2d, tm):
    Mp, Kp = x2d.shape
    return pl.pallas_call(
        _act_quant_kernel,
        out_shape=(jax.ShapeDtypeStruct((Mp, Kp), jnp.int8),
                   jax.ShapeDtypeStruct((Mp, 1), jnp.float32)),
        grid_spec=pltpu.PrefetchScalarGridSpec(
            num_scalar_prefetch=0,
            grid=(Mp // tm,),
            in_specs=[pl.BlockSpec((tm, Kp), lambda i: (i, 0))],
            out_specs=(pl.BlockSpec((tm, Kp), lambda i: (i, 0)),
                       pl.BlockSpec((tm, 1), lambda i: (i, 0))),
        ),
        compiler_params=_compiler_params(("parallel",)),
    )(x2d)


# --------------------- pass 2: quantized GEMM (base layer) ------------------

def _quant_matmul_kernel(xq_ref, wt_ref, sa_ref, sb_ref, bias_ref, o_ref,
                         acc_ref, *, use_int8):
    # xq_ref: (tm, tk) int8    quantized activations
    # wt_ref: (tk, tn) int8    quantized weight, already transposed to [K, N]
    # sa_ref: (tm, 1)  f32     rowmax(|x|)/127
    # sb_ref: (1, tn)  f32     SCB/127
    # bias_ref: (1, tn) f32
    # o_ref:  (tm, tn) bf16
    # acc_ref: (tm, tn) i32 (int8 path) or f32 (bf16 path)
    k = pl.program_id(2)

    @pl.when(k == 0)
    def _init():
        acc_ref[...] = jnp.zeros_like(acc_ref)

    if use_int8:
        acc_ref[...] += lax.dot_general(
            xq_ref[...], wt_ref[...],
            dimension_numbers=(((1,), (0,)), ((), ())),
            preferred_element_type=jnp.int32)
    else:
        acc_ref[...] += lax.dot_general(
            xq_ref[...].astype(jnp.bfloat16), wt_ref[...].astype(jnp.bfloat16),
            dimension_numbers=(((1,), (0,)), ((), ())),
            preferred_element_type=jnp.float32)

    @pl.when(k == pl.num_programs(2) - 1)
    def _finalize():
        scale = sa_ref[...] * sb_ref[...]                      # (tm,1)*(1,tn)
        out = acc_ref[...].astype(jnp.float32) * scale + bias_ref[...]
        o_ref[...] = out.astype(o_ref.dtype)


def linear8bitlt_forward(x, cb, scb, bias):
    """Base layer: bnb Linear8bitLt-style (threshold=0).
    x: [M, K] bf16; cb: [N, K] int8 row-quantized; scb: [N] f32; bias: [N] f32.
    """
    M, K = x.shape
    N = cb.shape[0]

    use_int8 = _use_int8_mxu()
    tm_max, tn_max, tk_max = _default_tiles()

    Mp = _round_up(M, 32)
    Kp = _round_up(K, 128)
    Np = _round_up(N, 128)

    tm = _pick_tile(Mp, tm_max, 32)
    tn = _pick_tile(Np, tn_max, 128)
    tk = _pick_tile(Kp, tk_max, 128)

    x_p = jnp.zeros((Mp, Kp), x.dtype).at[:M, :K].set(x)
    wt = jnp.zeros((Kp, Np), jnp.int8).at[:K, :N].set(cb.T)          # [K, N]
    sb = jnp.zeros((1, Np), jnp.float32).at[0, :N].set(
        scb.astype(jnp.float32) * (1.0 / 127.0))
    b2 = jnp.zeros((1, Np), jnp.float32).at[0, :N].set(bias.astype(jnp.float32))

    # Pass 1: hoisted row-wise activation quantization.
    xq, sa = _quantize_activations(x_p, tm)

    grid = (Mp // tm, Np // tn, Kp // tk)
    acc_dtype = jnp.int32 if use_int8 else jnp.float32
    kernel = functools.partial(_quant_matmul_kernel, use_int8=use_int8)

    out = pl.pallas_call(
        kernel,
        out_shape=jax.ShapeDtypeStruct((Mp, Np), x.dtype),
        grid_spec=pltpu.PrefetchScalarGridSpec(
            num_scalar_prefetch=0,
            grid=grid,
            in_specs=[
                pl.BlockSpec((tm, tk), lambda i, j, k: (i, k)),   # xq int8
                pl.BlockSpec((tk, tn), lambda i, j, k: (k, j)),   # W^T int8
                pl.BlockSpec((tm, 1), lambda i, j, k: (i, 0)),    # scale_a
                pl.BlockSpec((1, tn), lambda i, j, k: (0, j)),    # scale_b
                pl.BlockSpec((1, tn), lambda i, j, k: (0, j)),    # bias
            ],
            out_specs=pl.BlockSpec((tm, tn), lambda i, j, k: (i, j)),
            scratch_shapes=[pltpu.VMEM((tm, tn), acc_dtype)],
        ),
        compiler_params=_compiler_params(("parallel", "parallel", "arbitrary")),
        cost_estimate=pl.CostEstimate(
            flops=2 * Mp * Np * Kp,
            transcendentals=0,
            bytes_accessed=Mp * Kp + Kp * Np + 2 * Mp * Np + 4 * Mp + 8 * Np),
    )(xq, wt, sa, sb, b2)
    return out[:M, :N]


# ------------------------- LoRA adapter kernel -------------------------------

def _lora_kernel(x_ref, a_ref, b_ref, mask_ref, o_ref):
    # x_ref: (tm, K) bf16; a_ref: (K, r); b_ref: (r, tn); mask_ref: (tm, 1) f32
    xa = jnp.dot(x_ref[...].astype(jnp.bfloat16), a_ref[...].astype(jnp.bfloat16),
                 preferred_element_type=jnp.float32)
    out = jnp.dot(xa.astype(jnp.bfloat16), b_ref[...].astype(jnp.bfloat16),
                  preferred_element_type=jnp.float32)
    o_ref[...] = (out * mask_ref[...]).astype(o_ref.dtype)


def lora_adapter_forward(x, lora_a, lora_b, mask):
    """delta = ((x @ lora_a) @ lora_b) * mask.
    x: [M, K]; lora_a: [K, r]; lora_b: [r, Ns]; mask: [M, 1] -> [M, Ns]."""
    M, K = x.shape
    r = lora_a.shape[1]
    Ns = lora_b.shape[1]

    tm_max, tn_max, _ = _default_tiles()

    Mp = _round_up(M, 32)
    Kp = _round_up(K, 128)
    Np = _round_up(Ns, 128)

    tm = _pick_tile(Mp, tm_max, 32)
    tn = _pick_tile(Np, tn_max, 128)

    x_p = jnp.zeros((Mp, Kp), x.dtype).at[:M, :K].set(x)
    a_p = jnp.zeros((Kp, r), lora_a.dtype).at[:K, :].set(lora_a)
    b_p = jnp.zeros((r, Np), lora_b.dtype).at[:, :Ns].set(lora_b)
    m_p = jnp.zeros((Mp, 1), jnp.float32).at[:M, :].set(mask.astype(jnp.float32))

    out = pl.pallas_call(
        _lora_kernel,
        out_shape=jax.ShapeDtypeStruct((Mp, Np), x.dtype),
        grid_spec=pltpu.PrefetchScalarGridSpec(
            num_scalar_prefetch=0,
            grid=(Mp // tm, Np // tn),
            in_specs=[
                pl.BlockSpec((tm, Kp), lambda i, j: (i, 0)),
                pl.BlockSpec((Kp, r), lambda i, j: (0, 0)),
                pl.BlockSpec((r, tn), lambda i, j: (0, j)),
                pl.BlockSpec((tm, 1), lambda i, j: (i, 0)),
            ],
            out_specs=pl.BlockSpec((tm, tn), lambda i, j: (i, j)),
        ),
        compiler_params=_compiler_params(("parallel", "parallel")),
    )(x_p, a_p, b_p, m_p)
    return out[:M, :Ns]


# ----------------- TensorParallelMultiAdapterLinear forward ------------------

def tensor_parallel_multi_adapter_linear_forward(
        x, base_cb, base_scb, base_bias, sizes, lora_a, lora_b,
        adapter_indices, process_group_size=1):
    """
    x: [tokens, in_features] bf16
    base_cb/base_scb/base_bias: quantized base layer (bnb Linear8bitLt style)
    sizes: per-layer-name output sizes (sum(sizes)//world == out_features)
    lora_a[adapter][i]: [in_features, r]; lora_b[adapter][i]: [r, sizes[i]//world]
    adapter_indices: [tokens] int32 adapter id per token
    """
    # TODO(synk): sgmv segmented path and collect_lora_a all_gather (world>1)
    #             are not modeled; single-device masked per-adapter loop only.
    result = linear8bitlt_forward(x, base_cb, base_scb, base_bias)

    offset = 0
    for i in range(len(sizes)):
        start = offset // process_group_size
        offset += sizes[i]
        end = offset // process_group_size
        for adapter_index in sorted(lora_a.keys()):
            mask = (adapter_indices == adapter_index).astype(jnp.float32)[:, None]
            delta = lora_adapter_forward(
                x, lora_a[adapter_index][i], lora_b[adapter_index][i], mask)
            result = result.at[:, start:end].add(delta.astype(result.dtype))
    return result


# ------------------------------ reference ------------------------------------

def quantize_weight(w):
    """bnb Int8Params-style row-wise quantization.  w: [N, K] float."""
    wf = w.astype(jnp.float32)
    scb = jnp.maximum(jnp.max(jnp.abs(wf), axis=1), 1e-8)
    cb = jnp.clip(jnp.round(wf * (127.0 / scb[:, None])), -127, 127).astype(jnp.int8)
    return cb, scb


def reference_forward(x, cb, scb, bias, sizes, lora_a, lora_b, adapter_indices,
                      process_group_size=1):
    xf = x.astype(jnp.float32)
    amax = jnp.maximum(jnp.max(jnp.abs(xf), axis=-1, keepdims=True), 1e-8)
    xq = jnp.clip(jnp.round(xf * (127.0 / amax)), -127.0, 127.0)
    acc = xq @ cb.astype(jnp.float32).T
    result = (acc * (amax / 127.0) * (scb[None, :] / 127.0)
              + bias[None, :]).astype(x.dtype)

    offset = 0
    for i in range(len(sizes)):
        start = offset // process_group_size
        offset += sizes[i]
        end = offset // process_group_size
        for adapter_index in sorted(lora_a.keys()):
            mask = (adapter_indices == adapter_index).astype(jnp.float32)[:, None]
            xa = jnp.dot(x.astype(jnp.bfloat16),
                         lora_a[adapter_index][i].astype(jnp.bfloat16),
                         preferred_element_type=jnp.float32)
            delta = jnp.dot(xa.astype(jnp.bfloat16),
                            lora_b[adapter_index][i].astype(jnp.bfloat16),
                            preferred_element_type=jnp.float32) * mask
            result = result.at[:, start:end].add(delta.astype(result.dtype))
    return result


# --------------------------------- demo --------------------------------------

if __name__ == "__main__":
    key = jax.random.PRNGKey(0)
    ks = jax.random.split(key, 6)

    tokens, in_features = 16, 256          # batch=2, seq=8 flattened
    sizes = [256, 256]                     # two fused layer names (e.g. q, v)
    out_features = sum(sizes)
    rank = 16
    num_adapters = 2
    world = 1

    x = jax.random.normal(ks[0], (tokens, in_features), jnp.float32).astype(jnp.bfloat16)
    w = jax.random.normal(ks[1], (out_features, in_features), jnp.float32) * 0.05
    bias = jax.random.normal(ks[2], (out_features,), jnp.float32) * 0.1
    cb, scb = quantize_weight(w)

    adapter_indices = jax.random.randint(ks[3], (tokens,), 0, num_adapters)

    lora_a, lora_b = {}, {}
    for a in range(num_adapters):
        la, lb = [], []
        for i, sz in enumerate(sizes):
            ka = jax.random.fold_in(ks[4], a * 16 + i)
            kb = jax.random.fold_in(ks[5], a * 16 + i)
            la.append((jax.random.normal(ka, (in_features, rank), jnp.float32)
                       * 0.05).astype(jnp.bfloat16))
            lb.append((jax.random.normal(kb, (rank, sz // world), jnp.float32)
                       * 0.05).astype(jnp.bfloat16))
        lora_a[a] = la
        lora_b[a] = lb

    out = tensor_parallel_multi_adapter_linear_forward(
        x, cb, scb, bias, sizes, lora_a, lora_b, adapter_indices, world)
    out = jax.block_until_ready(out)

    ref = reference_forward(x, cb, scb, bias, sizes, lora_a, lora_b,
                            adapter_indices, world)

    assert out.shape == (tokens, out_features)
    assert out.dtype == x.dtype
    err = jnp.max(jnp.abs(out.astype(jnp.float32) - ref.astype(jnp.float32)))
    assert float(err) < 5e-2, f"mismatch vs reference: max abs err {float(err)}"
    print("KERNEL_OK")
</pallas_src>

<mosaic_0001>
module attributes {stable_mosaic.version = 11 : i64} {
  func.func @_act_quant_kernel(%arg0: i32, %arg1: memref<32x256xbf16, #tpu.memory_space<vmem>>, %arg2: memref<32x256xi8, #tpu.memory_space<vmem>>, %arg3: memref<32x1xf32, #tpu.memory_space<vmem>>) attributes {dimension_semantics = [#tpu.dimension_semantics<parallel>], iteration_bounds = array<i64: 1>, scalar_prefetch = 0 : i64, scratch_operands = 0 : i64, tpu.core_type = #tpu.core_type<tc>, window_params = [{transform_indices = @transform_0, window_bounds = array<i64: 32, 256>}, {transform_indices = @transform_1, window_bounds = array<i64: 32, 256>}, {transform_indices = @transform_2, window_bounds = array<i64: 32, 1>}]} {
    %c0 = arith.constant 0 : index
    %c0_0 = arith.constant 0 : index
    %0 = vector.load %arg1[%c0, %c0_0] : memref<32x256xbf16, #tpu.memory_space<vmem>>, vector<32x256xbf16>
    %1 = arith.extf %0 : vector<32x256xbf16> to vector<32x256xf32>
    %2 = math.absf %1 : vector<32x256xf32>
    %cst = arith.constant dense<0xFF800000> : vector<32xf32>
    %3 = vector.multi_reduction <maximumf>, %2, %cst [1] : vector<32x256xf32> to vector<32xf32>
    %4 = vector.shape_cast %3 : vector<32xf32> to vector<32x1xf32>
    %cst_1 = arith.constant 9.99999993E-9 : f32
    %5 = vector.broadcast %cst_1 : f32 to vector<32x1xf32>
    %6 = arith.maximumf %4, %5 : vector<32x1xf32>
    %cst_2 = arith.constant 1.270000e+02 : f32
    %7 = vector.broadcast %cst_2 : f32 to vector<32x1xf32>
    %8 = arith.divf %7, %6 : vector<32x1xf32>
    %9 = vector.broadcast %8 : vector<32x1xf32> to vector<32x256xf32>
    %10 = arith.mulf %1, %9 : vector<32x256xf32>
    %11 = math.roundeven %10 : vector<32x256xf32>
    %cst_3 = arith.constant -1.270000e+02 : f32
    %cst_4 = arith.constant 1.270000e+02 : f32
    %12 = vector.broadcast %cst_3 : f32 to vector<32x256xf32>
    %13 = arith.maximumf %12, %11 : vector<32x256xf32>
    %14 = vector.broadcast %cst_4 : f32 to vector<32x256xf32>
    %15 = arith.minimumf %14, %13 : vector<32x256xf32>
    %16 = arith.fptosi %15 : vector<32x256xf32> to vector<32x256xi8>
    %c0_5 = arith.constant 0 : index
    %c0_6 = arith.constant 0 : index
    %17 = vector.load %arg2[%c0_5, %c0_6] : memref<32x256xi8, #tpu.memory_space<vmem>>, vector<32x256xi8>
    tpu.vector_store %arg2[%c0_5, %c0_6], %16 {strides = array<i32>} : memref<32x256xi8, #tpu.memory_space<vmem>>, vector<32x256xi8>,
    %cst_7 = arith.constant 0.00787401571 : f32
    %18 = vector.broadcast %cst_7 : f32 to vector<32x1xf32>
    %19 = arith.mulf %6, %18 : vector<32x1xf32>
    %c0_8 = arith.constant 0 : index
    %c0_9 = arith.constant 0 : index
    %20 = vector.load %arg3[%c0_8, %c0_9] : memref<32x1xf32, #tpu.memory_space<vmem>>, vector<32x1xf32>
    tpu.vector_store %arg3[%c0_8, %c0_9], %19 {strides = array<i32>} : memref<32x1xf32, #tpu.memory_space<vmem>>, vector<32x1xf32>,
    return
  }
  func.func @transform_0(%arg0: i32) -> (i32, i32) {
    %c0_i32 = arith.constant 0 : i32
    %c0_i32_0 = arith.constant 0 : i32
    return %arg0, %c0_i32 : i32, i32
  }
  func.func @transform_1(%arg0: i32) -> (i32, i32) {
    %c0_i32 = arith.constant 0 : i32
    %c0_i32_0 = arith.constant 0 : i32
    return %arg0, %c0_i32 : i32, i32
  }
  func.func @transform_2(%arg0: i32) -> (i32, i32) {
    %c0_i32 = arith.constant 0 : i32
    %c0_i32_0 = arith.constant 0 : i32
    return %arg0, %c0_i32 : i32, i32
  }
}

</mosaic_0001>

<llo_original>
// kernel: tpu_custom_call.1
$region0: #{tpu_custom_call.1}
  #allocation0 [shape = 'u32[]', space=smem, size = 0x4, offset = 0x4, fixed_abs, tag = 'smem constant byte address 0x4 - core index']
  #allocation1 [shape = 'u32[144,128]{1,0:T(1,128)}', space=vmem, size = 0x12000, scoped, tag = 'internal scratch']
  %s0 = inlined_call_operand.hbm [shape: bf16[32,256], index: 0, kind: input, shape index: {}]
  %s1 = inlined_call_operand.hbm [shape: s8[32,256], index: 1, kind: output, shape index: {0}]
  %s2 = inlined_call_operand.vmem [shape: f32[32,1], index: 2, kind: output, shape index: {1}]
  %3 = xla_tuple %s1, %s2
  %s4 = sld [smem:[#allocation0]]
  $region26: #{tpu_custom_call.1} parent=0
    _
  %s6 = ssub.s32 1, %s4
  %s7 = scalar_select 0, %s6, %s4
  $region1: #{tpu_custom_call.1} parent=0
    #allocation2 [shape = 'u8[16384]{0}', space=vmem, size = 0x4000, scoped, tag = 'input window, operand 0, single buffered']
    #allocation3 [shape = 's32[1]{0}', space=sflag, size = 0x4, scoped, tag = 'scoped memory for tpu_custom_call.1']
    #allocation4 [shape = 's32[1]{0}', space=sflag, size = 0x4, scoped, tag = 'scoped memory for tpu_custom_call.1']
    #allocation5 [shape = 'u8[8192]{0}', space=vmem, size = 0x2000, scoped, tag = 'output window, operand 0, single buffered']
    %8 = vsyncpa [#allocation3], 0
    %9 = vsyncpa [#allocation4], 0
    // Predicated region
    $region2: #{tpu_custom_call.1} parent=1 // pred_check
      _
    $region3: #{tpu_custom_call.1} parent=1 // pred_check_branch
      %11 = sbr.rel (0) target = $region5
    $region4: #{tpu_custom_call.1} parent=1 // pred_region
      %s13 = ssub.s32 512, 512
      %14 = vsyncadd [#allocation3], %s13
      %s15 = sshll.u32 [#allocation2], 4
      %s16 = int_to_ptr.vmem [resolvable:$true] %s15
      %21 = dma.hbm_to_vmem [thread:$0]  %s0, 512, %s16, [#allocation3], 128, 128, 8
    $region5: #{tpu_custom_call.1} parent=1 // pred_fallthru
      _
    // Predicated region
    $region6: #{tpu_custom_call.1} parent=1 // pred_check
      _
    $region7: #{tpu_custom_call.1} parent=1 // pred_check_branch
      %23 = sbr.rel (0) target = $region9
    $region8: #{tpu_custom_call.1} parent=1 // pred_region
      %24 = dma.done [#allocation3], 512
    $region9: #{tpu_custom_call.1} parent=1 // pred_fallthru
      _
    %v25 = vld [vmem:[#allocation2] sm:$0xff]
    %v26 = vld [vmem:[#allocation2 + $0x8] sm:$0xff]
    %v27 = vld [vmem:[#allocation2 + $0x10] sm:$0xff]
    %v28 = vld [vmem:[#allocation2 + $0x18] sm:$0xff]
    %v29 = vunpack.c.l.bf16 %v25
    %v30 = vunpack.c.h.bf16 %v25
    %v31 = vunpack.c.l.bf16 %v26
    %v32 = vunpack.c.h.bf16 %v26
    %v33 = vunpack.c.l.bf16 %v27
    %v34 = vunpack.c.h.bf16 %v27
    %v35 = vunpack.c.l.bf16 %v28
    %v36 = vunpack.c.h.bf16 %v28
    %v37 = vand.u32 2147483647, %v29
    %v38 = vand.u32 2147483647, %v30
    %v39 = vand.u32 2147483647, %v31
    %v40 = vand.u32 2147483647, %v32
    %v41 = vand.u32 2147483647, %v33
    %v42 = vand.u32 2147483647, %v34
    %v43 = vand.u32 2147483647, %v35
    %v44 = vand.u32 2147483647, %v36
    %v45 = vmax.f32 %v37, %v38
    %46 = vmax.xlane.f32.xlu0 %v45
    %v47 = vpop.xlane.xlu0 %46
    %v48 = vmax.f32 %v39, %v40
    %49 = vmax.xlane.f32.xlu0 %v48
    %v50 = vpop.xlane.xlu0 %49
    %v51 = vmax.f32 %v41, %v42
    %52 = vmax.xlane.f32.xlu0 %v51
    %v53 = vpop.xlane.xlu0 %52
    %v54 = vmax.f32 %v43, %v44
    %55 = vmax.xlane.f32.xlu0 %v54
    %v56 = vpop.xlane.xlu0 %55
    %v57 = vmax.f32 %v47, 1e-08
    %v58 = vmax.f32 %v50, 1e-08
    %v59 = vmax.f32 %v53, 1e-08
    %v60 = vmax.f32 %v56, 1e-08
    %v61 = vrcp.pop %v57
    %v62 = vmul.f32 127.0, %v61
    %v63 = vrcp.pop %v58
    %v64 = vmul.f32 127.0, %v63
    %v65 = vrcp.pop %v59
    %v66 = vmul.f32 127.0, %v65
    %v67 = vrcp.pop %v60
    %v68 = vmul.f32 127.0, %v67
    %v69 = vmul.f32 %v29, %v62
    %v70 = vmul.f32 %v30, %v62
    %v71 = vmul.f32 %v31, %v64
    %v72 = vmul.f32 %v32, %v64
    %v73 = vmul.f32 %v33, %v66
    %v74 = vmul.f32 %v34, %v66
    %v75 = vmul.f32 %v35, %v68
    %v76 = vmul.f32 %v36, %v68
    %v77 = vround.ne.pseudo %v69
    %v78 = vround.ne.pseudo %v70
    %v79 = vround.ne.pseudo %v71
    %v80 = vround.ne.pseudo %v72
    %v81 = vround.ne.pseudo %v73
    %v82 = vround.ne.pseudo %v74
    %v83 = vround.ne.pseudo %v75
    %v84 = vround.ne.pseudo %v76
    %v85 = vmax.f32 %v77, -127.0
    %v86 = vmax.f32 %v78, -127.0
    %v87 = vmax.f32 %v79, -127.0
    %v88 = vmax.f32 %v80, -127.0
    %v89 = vmax.f32 %v81, -127.0
    %v90 = vmax.f32 %v82, -127.0
    %v91 = vmax.f32 %v83, -127.0
    %v92 = vmax.f32 %v84, -127.0
    %v93 = vmin.f32 %v85, 127.0
    %v94 = vmin.f32 %v86, 127.0
    %v95 = vmin.f32 %v87, 127.0
    %v96 = vmin.f32 %v88, 127.0
    %v97 = vmin.f32 %v89, 127.0
    %v98 = vmin.f32 %v90, 127.0
    %v99 = vmin.f32 %v91, 127.0
    %v100 = vmin.f32 %v92, 127.0
    %v101 = vmax.f32 %v93, -128.0
    %v102 = vmax.f32 %v94, -128.0
    %v103 = vmax.f32 %v95, -128.0
    %v104 = vmax.f32 %v96, -128.0
    %v105 = vmax.f32 %v97, -128.0
    %v106 = vmax.f32 %v98, -128.0
    %v107 = vmax.f32 %v99, -128.0
    %v108 = vmax.f32 %v100, -128.0
    %v109 = vmin.f32 %v101, 127.0
    %v110 = vmin.f32 %v102, 127.0
    %v111 = vmin.f32 %v103, 127.0
    %v112 = vmin.f32 %v104, 127.0
    %v113 = vmin.f32 %v105, 127.0
    %v114 = vmin.f32 %v106, 127.0
    %v115 = vmin.f32 %v107, 127.0
    %v116 = vmin.f32 %v108, 127.0
    %v117 = vcvt.f32.s32.to.zero.pseudo %v109
    %v118 = vcvt.f32.s32.to.zero.pseudo %v110
    %v119 = vcvt.f32.s32.to.zero.pseudo %v111
    %v120 = vcvt.f32.s32.to.zero.pseudo %v112
    %v121 = vcvt.f32.s32.to.zero.pseudo %v113
    %v122 = vcvt.f32.s32.to.zero.pseudo %v114
    %v123 = vcvt.f32.s32.to.zero.pseudo %v115
    %v124 = vcvt.f32.s32.to.zero.pseudo %v116
    %v125 = vpack.c.b16 %v119, %v117
    %v126 = vpack.c.b16 %v123, %v121
    %v127 = vpack.c.b8 %v126, %v125
    %v128 = vpack.c.b16 %v120, %v118
    %v129 = vpack.c.b16 %v124, %v122
    %v130 = vpack.c.b8 %v129, %v128
    %131 = vst [vmem:[#allocation5] sm:$0xff] %v127
    %132 = vst [vmem:[#allocation5 + $0x8] sm:$0xff] %v130
    %v133 = vmul.f32 %v57, 0.007874016
    %v134 = vmul.f32 %v58, 0.007874016
    %v135 = vmul.f32 %v59, 0.007874016
    %v136 = vmul.f32 %v60, 0.007874016
    %vm137 = vcmask 7168
    %138 = vst.msk [vmem:[%s2] sm:$0xff] %vm137, %v133
    %139 = vst.msk [vmem:[%s2 + $0x8] sm:$0xff] %vm137, %v134
    %140 = vst.msk [vmem:[%s2 + $0x10] sm:$0xff] %vm137, %v135
    %141 = vst.msk [vmem:[%s2 + $0x18] sm:$0xff] %vm137, %v136
    // Predicated region
    $region10: #{tpu_custom_call.1} parent=1 // pred_check
      _
    $region11: #{tpu_custom_call.1} parent=1 // pred_check_branch
      %143 = sbr.rel (0) target = $region13
    $region12: #{tpu_custom_call.1} parent=1 // pred_region
      %s145 = ssub.s32 256, 256
      %146 = vsyncadd [#allocation4], %s145
      %s148 = sshll.u32 [#allocation5], 4
      %s149 = int_to_ptr.vmem [resolvable:$true] %s148
      %151 = dma.vmem_to_hbm [thread:$0]  %s149, 256, %s1, [#allocation4]
    $region13: #{tpu_custom_call.1} parent=1 // pred_fallthru
      _
    // Predicated region
    $region14: #{tpu_custom_call.1} parent=1 // pred_check
      _
    $region15: #{tpu_custom_call.1} parent=1 // pred_check_branch
      %153 = sbr.rel (0) target = $region17
    $region16: #{tpu_custom_call.1} parent=1 // pred_region
      _
    $region17: #{tpu_custom_call.1} parent=1 // pred_fallthru
      _
    // Predicated region
    $region18: #{tpu_custom_call.1} parent=1 // pred_check
      _
    $region19: #{tpu_custom_call.1} parent=1 // pred_check_branch
      %155 = sbr.rel (0) target = $region21
    $region20: #{tpu_custom_call.1} parent=1 // pred_region
      %156 = dma.done [#allocation4], 256
    $region21: #{tpu_custom_call.1} parent=1 // pred_fallthru
      _
    // Predicated region
    $region22: #{tpu_custom_call.1} parent=1 // pred_check
      _
    $region23: #{tpu_custom_call.1} parent=1 // pred_check_branch
      %158 = sbr.rel (0) target = $region25
    $region24: #{tpu_custom_call.1} parent=1 // pred_region
      _
    $region25: #{tpu_custom_call.1} parent=1 // pred_fallthru
      _
    %159 = vsyncpa [#allocation3], 1
    %160 = vsyncpa [#allocation4], 1

</llo_original>
